<compile_context>
chip_gen: v7x
topology: tpu7x:2x2x1
jax: 0.10.0
libtpu: 0.0.40
codegen_flags: <defaults>
</compile_context>

<pallas_src>
import functools

import jax
import jax.numpy as jnp
from jax import lax
from jax.experimental import pallas as pl
from jax.experimental.pallas import tpu as pltpu


def mix_kernel(w_ref, p_ref, b_ref, a_ref, o_ref):
    # Single fused MXU matmul: (4C, K) @ (K, tm) -> (4C, tm), f32 accumulate.
    y = jnp.dot(w_ref[...], p_ref[...], preferred_element_type=jnp.float32)
    y = y + b_ref[...]                                  # combined bias (4C, 1)
    # per-(phase, channel) PReLU (alpha tiled over the 4 phases)
    o_ref[...] = jnp.where(y >= 0.0, y, a_ref[...] * y).astype(o_ref.dtype)


def _round_up(a, b):
    return -(-a // b) * b


def _patches_deep(x_deep):
    """3x3, stride-1, pad-1 patches of x_deep.  K-order = (ci, ry, rx)."""
    N, CD, Hc, Wc = x_deep.shape
    xp = jnp.pad(x_deep, ((0, 0), (0, 0), (1, 1), (1, 1)))
    cols = [xp[:, :, ry:ry + Hc, rx:rx + Wc] for ry in range(3) for rx in range(3)]
    p = jnp.stack(cols, axis=2)              # (N, CD, 9, Hc, Wc)
    p = p.transpose(0, 3, 4, 1, 2)           # (N, Hc, Wc, CD, 9)
    return p.reshape(N * Hc * Wc, CD * 9)


def _patches_x(x):
    """4x4, stride-2, pad-1 patches of x (one per coarse pos).  K-order = (ci, sy, sx)."""
    N, C, H, W = x.shape
    Hc, Wc = H // 2, W // 2
    xp = jnp.pad(x, ((0, 0), (0, 0), (1, 1), (1, 1)))
    cols = [xp[:, :, sy:sy + H:2, sx:sx + W:2] for sy in range(4) for sx in range(4)]
    p = jnp.stack(cols, axis=2)              # (N, C, 16, Hc, Wc)
    p = p.transpose(0, 3, 4, 1, 2)           # (N, Hc, Wc, C, 16)
    return p.reshape(N * Hc * Wc, C * 16)


def _fused_weights(w0, b0, w1, b1, beta, gamma, C, CD):
    """Build one (4C, K) weight + (4C,) bias.  Row order = (dy, dx, c)."""
    # ConvTranspose2d(CD, C, 4, 2, 1) as 4 phases over a shared 3x3 window:
    #   out(2i+dy, 2j+dx) += w0[ci, c, kh, kw] * x_deep[ci, i+ry-1, j+rx-1]
    #   with kh = 3 - 2*ry + dy, kw = 3 - 2*rx + dx (out-of-range taps are 0).
    w0_eff = jnp.zeros((2, 2, C, CD, 3, 3), jnp.float32)
    for dy in range(2):
        for dx in range(2):
            for ry in range(3):
                kh = 3 - 2 * ry + dy
                if not 0 <= kh <= 3:
                    continue
                for rx in range(3):
                    kw = 3 - 2 * rx + dx
                    if not 0 <= kw <= 3:
                        continue
                    w0_eff = w0_eff.at[dy, dx, :, :, ry, rx].set(w0[:, :, kh, kw].T)

    # Conv2d(C, C, 3, 1, 1) over the shared 4x4 window:
    #   out(2i+dy, 2j+dx) += w1[c, ci, kh, kw] * x[ci, 2i-1+(dy+kh), 2j-1+(dx+kw)]
    w1_eff = jnp.zeros((2, 2, C, C, 4, 4), jnp.float32)
    for dy in range(2):
        for dx in range(2):
            w1_eff = w1_eff.at[dy, dx, :, :, dy:dy + 3, dx:dx + 3].set(w1)

    # Fold beta / gamma into the weights, biases into one vector.
    w0_m = (w0_eff * beta[None, None, :, None, None, None]).reshape(4 * C, CD * 9)
    w1_m = (w1_eff * gamma[None, None, :, None, None, None]).reshape(4 * C, C * 16)
    w_fused = jnp.concatenate([w0_m, w1_m], axis=1)          # (4C, CD*9 + C*16)
    bias_fused = jnp.tile(b0 * beta + b1 * gamma, 4)         # (4C,)
    return w_fused, bias_fused


@functools.partial(jax.jit, static_argnames=("tm_max",))
def mix_forward(x, x_deep, t, params, tm_max=512):
    """x: (N, C, H, W), x_deep: (N, CD, H//2, W//2), t: unused (as in the module)."""
    del t  # module signature accepts t but never uses it
    w0, b0 = params["w0"], params["b0"]      # ConvTranspose2d: (CD, C, 4, 4), (C,)
    w1, b1 = params["w1"], params["b1"]      # Conv2d:          (C,  C, 3, 3), (C,)
    beta = params["beta"].reshape(-1).astype(jnp.float32)
    gamma = params["gamma"].reshape(-1).astype(jnp.float32)
    alpha = params["alpha"].reshape(-1).astype(jnp.float32)

    N, C, H, W = x.shape
    CD = x_deep.shape[1]
    assert H % 2 == 0 and W % 2 == 0
    Hc, Wc = H // 2, W // 2
    assert x_deep.shape == (N, CD, Hc, Wc)
    assert tm_max % 128 == 0

    w_fused, bias_fused = _fused_weights(
        w0.astype(jnp.float32), b0.astype(jnp.float32),
        w1.astype(jnp.float32), b1.astype(jnp.float32), beta, gamma, C, CD)
    K = w_fused.shape[1]                     # CD*9 + C*16
    alpha_fused = jnp.tile(alpha, 4)

    # TODO(synk): for production-sized H/W, form these patches inside the kernel
    # from raw x / x_deep tiles (static slices) instead of materializing im2col.
    p = jnp.concatenate([_patches_deep(x_deep), _patches_x(x)], axis=1)   # (M', K)
    p_t = p.T                                                             # (K, M')

    Mp = N * Hc * Wc
    M_pad = _round_up(Mp, 128)
    if M_pad <= tm_max:
        tm = M_pad                           # single grid step for small problems
    else:
        tm = tm_max                          # multiple steps; "parallel" lets v7x
        M_pad = _round_up(M_pad, tm)         # shard them across its 2 TensorCores
    if M_pad != Mp:
        p_t = jnp.pad(p_t, ((0, 0), (0, M_pad - Mp)))

    # bf16 streams (halves patch DMA bytes, native MXU rate); f32 epilogue.
    w_bf = w_fused.astype(jnp.bfloat16)
    p_bf = p_t.astype(jnp.bfloat16)
    b_col = bias_fused.reshape(4 * C, 1)
    a_col = alpha_fused.reshape(4 * C, 1)

    out = pl.pallas_call(
        mix_kernel,
        out_shape=jax.ShapeDtypeStruct((4 * C, M_pad), jnp.float32),
        grid_spec=pltpu.PrefetchScalarGridSpec(
            num_scalar_prefetch=0,
            grid=(M_pad // tm,),
            in_specs=[
                pl.BlockSpec((4 * C, K), lambda i: (0, 0)),   # fused weights (const)
                pl.BlockSpec((K, tm), lambda i: (0, i)),      # fused patches (streamed)
                pl.BlockSpec((4 * C, 1), lambda i: (0, 0)),   # combined bias
                pl.BlockSpec((4 * C, 1), lambda i: (0, 0)),   # PReLU alpha
            ],
            out_specs=pl.BlockSpec((4 * C, tm), lambda i: (0, i)),
        ),
        compiler_params=pltpu.CompilerParams(dimension_semantics=("parallel",)),
    )(w_bf, p_bf, b_col, a_col)

    # (4C, M') rows = (dy, dx, c), cols = (n, i, j)  ->  NCHW with pixel shuffle.
    out = out[:, :Mp].reshape(2, 2, C, N, Hc, Wc)
    out = out.transpose(3, 2, 4, 0, 5, 1)            # (N, C, Hc, dy, Wc, dx)
    return out.reshape(N, C, H, W)


def reference_forward(x, x_deep, params):
    """Pure-JAX reference using XLA convolutions (same math as the torch module)."""
    w0, b0 = params["w0"], params["b0"]
    w1, b1 = params["w1"], params["b1"]
    beta, gamma, alpha = params["beta"], params["gamma"], params["alpha"]
    C = x.shape[1]

    # ConvTranspose2d(cd, c, 4, 2, 1) == lhs-dilated conv with flipped/transposed kernel
    w0_eq = jnp.flip(jnp.transpose(w0, (1, 0, 2, 3)), axis=(2, 3))    # (C, CD, 4, 4)
    y0 = lax.conv_general_dilated(
        x_deep, w0_eq, window_strides=(1, 1), padding=((2, 2), (2, 2)),
        lhs_dilation=(2, 2), dimension_numbers=("NCHW", "OIHW", "NCHW"))
    y0 = y0 + b0.reshape(1, C, 1, 1)

    y1 = lax.conv_general_dilated(
        x, w1, window_strides=(1, 1), padding=((1, 1), (1, 1)),
        dimension_numbers=("NCHW", "OIHW", "NCHW"))
    y1 = y1 + b1.reshape(1, C, 1, 1)

    y = y0 * beta + y1 * gamma
    a = alpha.reshape(1, C, 1, 1)
    return jnp.where(y >= 0.0, y, a * y)


if __name__ == "__main__":
    # Small shapes consistent with the module: c=8, cd=16, N=2, H=W=16.
    N, C, CD, H, W = 2, 8, 16, 16, 16

    key = jax.random.PRNGKey(0)
    k_x, k_xd, k_w0, k_b0, k_w1, k_b1 = jax.random.split(key, 6)

    x = jax.random.normal(k_x, (N, C, H, W), jnp.float32)
    x_deep = jax.random.normal(k_xd, (N, CD, H // 2, W // 2), jnp.float32)
    t = jnp.zeros((N,), jnp.float32)  # unused by the forward pass

    # Non-trivial beta/gamma/alpha so the weight/bias folding is exercised.
    params = {
        "w0": 0.1 * jax.random.normal(k_w0, (CD, C, 4, 4), jnp.float32),  # ConvT weight
        "b0": 0.1 * jax.random.normal(k_b0, (C,), jnp.float32),
        "w1": 0.1 * jax.random.normal(k_w1, (C, C, 3, 3), jnp.float32),   # Conv weight
        "b1": 0.1 * jax.random.normal(k_b1, (C,), jnp.float32),
        "beta": jnp.linspace(0.5, 1.5, C, dtype=jnp.float32).reshape(1, C, 1, 1),
        "gamma": jnp.linspace(1.25, 0.75, C, dtype=jnp.float32).reshape(1, C, 1, 1),
        "alpha": jnp.linspace(0.1, 0.3, C, dtype=jnp.float32),            # PReLU slopes
    }

    out = jax.block_until_ready(mix_forward(x, x_deep, t, params))
    ref = jax.block_until_ready(reference_forward(x, x_deep, params))

    assert out.shape == (N, C, H, W), out.shape
    max_err = float(jnp.max(jnp.abs(out - ref)))
    scale = float(jnp.max(jnp.abs(ref))) + 1e-6
    assert max_err / scale < 1e-2, f"mismatch: max_err={max_err}, scale={scale}"

    print("KERNEL_OK")
</pallas_src>

<mosaic_0001>
module attributes {stable_mosaic.version = 11 : i64} {
  func.func @mix_kernel(%arg0: i32, %arg1: memref<32x272xbf16, #tpu.memory_space<vmem>>, %arg2: memref<272x128xbf16, #tpu.memory_space<vmem>>, %arg3: memref<32x1xf32, #tpu.memory_space<vmem>>, %arg4: memref<32x1xf32, #tpu.memory_space<vmem>>, %arg5: memref<32x128xf32, #tpu.memory_space<vmem>>) attributes {dimension_semantics = [#tpu.dimension_semantics<parallel>], iteration_bounds = array<i64: 1>, scalar_prefetch = 0 : i64, scratch_operands = 0 : i64, tpu.core_type = #tpu.core_type<tc>, window_params = [{pipeline_mode = #tpu.pipeline_mode<synchronous>, transform_indices = @transform_0, window_bounds = array<i64: 32, 272>}, {transform_indices = @transform_1, window_bounds = array<i64: 272, 128>}, {pipeline_mode = #tpu.pipeline_mode<synchronous>, transform_indices = @transform_2, window_bounds = array<i64: 32, 1>}, {pipeline_mode = #tpu.pipeline_mode<synchronous>, transform_indices = @transform_3, window_bounds = array<i64: 32, 1>}, {transform_indices = @transform_4, window_bounds = array<i64: 32, 128>}]} {
    %c0 = arith.constant 0 : index
    %c0_0 = arith.constant 0 : index
    %0 = vector.load %arg1[%c0, %c0_0] : memref<32x272xbf16, #tpu.memory_space<vmem>>, vector<32x272xbf16>
    %c0_1 = arith.constant 0 : index
    %c0_2 = arith.constant 0 : index
    %1 = vector.load %arg2[%c0_1, %c0_2] : memref<272x128xbf16, #tpu.memory_space<vmem>>, vector<272x128xbf16>
    %cst = arith.constant dense<0.000000e+00> : vector<32x128xf32>
    %2 = tpu.matmul %0, %1, %cst {dimension_numbers = #tpu.dot_dimension_numbers<[1], [0], [0], [1], [0, 0, 1, 1], [], []>} : vector<32x272xbf16>, vector<272x128xbf16>, vector<32x128xf32> -> vector<32x128xf32>
    %c0_3 = arith.constant 0 : index
    %c0_4 = arith.constant 0 : index
    %3 = vector.load %arg3[%c0_3, %c0_4] : memref<32x1xf32, #tpu.memory_space<vmem>>, vector<32x1xf32>
    %4 = vector.broadcast %3 : vector<32x1xf32> to vector<32x128xf32>
    %5 = arith.addf %2, %4 : vector<32x128xf32>
    %cst_5 = arith.constant 0.000000e+00 : f32
    %6 = vector.broadcast %cst_5 : f32 to vector<32x128xf32>
    %7 = arith.cmpf oge, %5, %6 : vector<32x128xf32>
    %c0_6 = arith.constant 0 : index
    %c0_7 = arith.constant 0 : index
    %8 = vector.load %arg4[%c0_6, %c0_7] : memref<32x1xf32, #tpu.memory_space<vmem>>, vector<32x1xf32>
    %9 = vector.broadcast %8 : vector<32x1xf32> to vector<32x128xf32>
    %10 = arith.mulf %9, %5 : vector<32x128xf32>
    %11 = arith.select %7, %5, %10 : vector<32x128xi1>, vector<32x128xf32>
    %c0_8 = arith.constant 0 : index
    %c0_9 = arith.constant 0 : index
    %12 = vector.load %arg5[%c0_8, %c0_9] : memref<32x128xf32, #tpu.memory_space<vmem>>, vector<32x128xf32>
    tpu.vector_store %arg5[%c0_8, %c0_9], %11 {strides = array<i32>} : memref<32x128xf32, #tpu.memory_space<vmem>>, vector<32x128xf32>,
    return
  }
  func.func @transform_0(%arg0: i32) -> (i32, i32) {
    %c0_i32 = arith.constant 0 : i32
    %c0_i32_0 = arith.constant 0 : i32
    %c0_i32_1 = arith.constant 0 : i32
    return %c0_i32, %c0_i32_0 : i32, i32
  }
  func.func @transform_1(%arg0: i32) -> (i32, i32) {
    %c0_i32 = arith.constant 0 : i32
    %c0_i32_0 = arith.constant 0 : i32
    return %c0_i32, %arg0 : i32, i32
  }
  func.func @transform_2(%arg0: i32) -> (i32, i32) {
    %c0_i32 = arith.constant 0 : i32
    %c0_i32_0 = arith.constant 0 : i32
    %c0_i32_1 = arith.constant 0 : i32
    return %c0_i32, %c0_i32_0 : i32, i32
  }
  func.func @transform_3(%arg0: i32) -> (i32, i32) {
    %c0_i32 = arith.constant 0 : i32
    %c0_i32_0 = arith.constant 0 : i32
    %c0_i32_1 = arith.constant 0 : i32
    return %c0_i32, %c0_i32_0 : i32, i32
  }
  func.func @transform_4(%arg0: i32) -> (i32, i32) {
    %c0_i32 = arith.constant 0 : i32
    %c0_i32_0 = arith.constant 0 : i32
    return %c0_i32, %arg0 : i32, i32
  }
}

</mosaic_0001>

<llo_original>
// kernel: tile.13
$region0: #{tile.13}
  #allocation0 [shape = 's32[1]{0}', space=sflag, size = 0x4, scoped, tag = 'scoped memory for tile.13']
  %s0 = inlined_call_operand.vmem [shape: f32[8], index: 0, kind: input, shape index: {}]
  %s1 = inlined_call_operand.vmem [shape: f32[4,8], index: 1, kind: output, shape index: {}]
  // Predicated region
  $region2: #{tile.13} parent=0 // pred_check
    _
  $region3: #{tile.13} parent=0 // pred_check_branch
    %3 = sbr.rel (0) target = $region5
  $region4: #{tile.13} parent=0 // pred_region
    _
  $region5: #{tile.13} parent=0 // pred_fallthru
    _
  %v4 = vld [vmem:[%s0] ss:$0 sm:$0xff]
  %5 = vst [vmem:[%s1] sm:$0xf] %v4

// kernel: tile.0
$region0: #{tile.0}
  %s0 = inlined_call_operand.vmem [shape: f32[4,8], index: 0, kind: input, shape index: {}]
  %s1 = inlined_call_operand.vmem [shape: f32[32,1], index: 1, kind: output, shape index: {}]
  $region1: #{tile.0} parent=0
    #allocation0 [shape = 'u8[4096]{0}', space=vmem, size = 0x1000, scoped, tag = 'scoped mem for input reshape']
    %s3 = sshllo.u32 0, 4
    %v4 = vld [vmem:[%s0] sm:%s3]
    %5 = vst [vmem:[#allocation0] sm:%s3] %v4
    %v6 = vld [vmem:[#allocation0] sm:$0xf]
    %vm7 = vcmask 7168
    %8 = vst.msk [vmem:[%s1] ss:$8 sm:$0xf] %vm7, %v6
    %v9 = vld [vmem:[#allocation0] sm:$0xf]
    %10 = vrot.lane.b32.xlu0 %v9, 127
    %v11 = vpop.permute.xlu0 %10
    %vm12 = vcmask 7168
    %s13 = scalar_lea.vmem %s1, 1
    %14 = vst.msk [vmem:[%s13] ss:$8 sm:$0xf] %vm12, %v11
    %v15 = vld [vmem:[#allocation0] sm:$0xf]
    %16 = vrot.lane.b32.xlu0 %v15, 126
    %v17 = vpop.permute.xlu0 %16
    %vm18 = vcmask 7168
    %s19 = scalar_lea.vmem %s1, 2
    %20 = vst.msk [vmem:[%s19] ss:$8 sm:$0xf] %vm18, %v17
    %v21 = vld [vmem:[#allocation0] sm:$0xf]
    %22 = vrot.lane.b32.xlu0 %v21, 125
    %v23 = vpop.permute.xlu0 %22
    %vm24 = vcmask 7168
    %s25 = scalar_lea.vmem %s1, 3
    %26 = vst.msk [vmem:[%s25] ss:$8 sm:$0xf] %vm24, %v23
    %v27 = vld [vmem:[#allocation0] sm:$0xf]
    %28 = vrot.lane.b32.xlu0 %v27, 124
    %v29 = vpop.permute.xlu0 %28
    %vm30 = vcmask 7168
    %s31 = scalar_lea.vmem %s1, 4
    %32 = vst.msk [vmem:[%s31] ss:$8 sm:$0xf] %vm30, %v29
    %v33 = vld [vmem:[#allocation0] sm:$0xf]
    %34 = vrot.lane.b32.xlu0 %v33, 123
    %v35 = vpop.permute.xlu0 %34
    %vm36 = vcmask 7168
    %s37 = scalar_lea.vmem %s1, 5
    %38 = vst.msk [vmem:[%s37] ss:$8 sm:$0xf] %vm36, %v35
    %v39 = vld [vmem:[#allocation0] sm:$0xf]
    %40 = vrot.lane.b32.xlu0 %v39, 122
    %v41 = vpop.permute.xlu0 %40
    %vm42 = vcmask 7168
    %s43 = scalar_lea.vmem %s1, 6
    %44 = vst.msk [vmem:[%s43] ss:$8 sm:$0xf] %vm42, %v41
    %v45 = vld [vmem:[#allocation0] sm:$0xf]
    %46 = vrot.lane.b32.xlu0 %v45, 121
    %v47 = vpop.permute.xlu0 %46
    %vm48 = vcmask 7168
    %s49 = scalar_lea.vmem %s1, 7
    %50 = vst.msk [vmem:[%s49] ss:$8 sm:$0xf] %vm48, %v47

// kernel: mix_forward.1
$region0: #{mix_forward.1}
  #allocation0 [shape = 'u32[]', space=smem, size = 0x4, offset = 0x4, fixed_abs, tag = 'smem constant byte address 0x4 - core index']
  #allocation1 [shape = 'u32[144,128]{1,0:T(1,128)}', space=vmem, size = 0x12000, scoped, tag = 'internal scratch']
  %s0 = inlined_call_operand.vmem [shape: bf16[32,272], index: 0, kind: input, shape index: {}]
  %s1 = inlined_call_operand.vmem [shape: bf16[272,128], index: 1, kind: input, shape index: {}]
  %s2 = inlined_call_operand.vmem [shape: f32[32,1], index: 2, kind: input, shape index: {}]
  %s3 = inlined_call_operand.vmem [shape: f32[32,1], index: 3, kind: input, shape index: {}]
  %s4 = inlined_call_operand.vmem [shape: f32[32,128], index: 4, kind: output, shape index: {}]
  %s5 = sld [smem:[#allocation0]]
  $region26: #{mix_forward.1} parent=0
    _
  %s7 = ssub.s32 1, %s5
  %s8 = scalar_select 0, %s7, %s5
  // Predicated region
  $region2: #{mix_forward.1} parent=0 // pred_check
    _
  $region3: #{mix_forward.1} parent=0 // pred_check_branch
    %10 = sbr.rel (0) target = $region5
  $region4: #{mix_forward.1} parent=0 // pred_region
    _
  $region5: #{mix_forward.1} parent=0 // pred_fallthru
    _
  // Predicated region
  $region6: #{mix_forward.1} parent=0 // pred_check
    _
  $region7: #{mix_forward.1} parent=0 // pred_check_branch
    %12 = sbr.rel (0) target = $region9
  $region8: #{mix_forward.1} parent=0 // pred_region
    _
  $region9: #{mix_forward.1} parent=0 // pred_fallthru
    _
  // Predicated region
  $region10: #{mix_forward.1} parent=0 // pred_check
    _
  $region11: #{mix_forward.1} parent=0 // pred_check_branch
    %14 = sbr.rel (0) target = $region13
  $region12: #{mix_forward.1} parent=0 // pred_region
    _
  $region13: #{mix_forward.1} parent=0 // pred_fallthru
    _
  // Predicated region
  $region14: #{mix_forward.1} parent=0 // pred_check
    _
  $region15: #{mix_forward.1} parent=0 // pred_check_branch
    %16 = sbr.rel (0) target = $region17
  $region16: #{mix_forward.1} parent=0 // pred_region
    _
  $region17: #{mix_forward.1} parent=0 // pred_fallthru
    _
  %v18 = vld [vmem:[%s0] sm:$0xff]
  %v19 = vld [vmem:[%s0 + $0x8] sm:$0xf]
  %v20 = vld [vmem:[%s0 + $0xc] sm:$0xff]
  %v21 = vld [vmem:[%s0 + $0x14] sm:$0xf]
  %v22 = vld [vmem:[%s0 + $0x18] sm:$0xff]
  %v23 = vld [vmem:[%s0 + $0x20] sm:$0xf]
  %v24 = vld [vmem:[%s0 + $0x24] sm:$0xff]
  %v25 = vld [vmem:[%s0 + $0x2c] sm:$0xf]
  %v26 = vld [vmem:[%s1] sm:$0xf]
  %v27 = vld [vmem:[%s1 + $0x4] sm:$0xf]
  %v28 = vld [vmem:[%s1 + $0x8] sm:$0xf]
  %v29 = vld [vmem:[%s1 + $0xc] sm:$0xf]
  %v30 = vld [vmem:[%s1 + $0x10] sm:$0xf]
  %v31 = vld [vmem:[%s1 + $0x14] sm:$0xf]
  %v32 = vld [vmem:[%s1 + $0x18] sm:$0xf]
  %v33 = vld [vmem:[%s1 + $0x1c] sm:$0xf]
  %v34 = vld [vmem:[%s1 + $0x20] sm:$0xf]
  %v35 = vld [vmem:[%s1 + $0x24] sm:$0xf]
  %v36 = vld [vmem:[%s1 + $0x28] sm:$0xf]
  %v37 = vld [vmem:[%s1 + $0x2c] sm:$0xf]
  %v38 = vld [vmem:[%s1 + $0x30] sm:$0xf]
  %v39 = vld [vmem:[%s1 + $0x34] sm:$0xf]
  %v40 = vld [vmem:[%s1 + $0x38] sm:$0xf]
  %v41 = vld [vmem:[%s1 + $0x3c] sm:$0xf]
  %v42 = vld [vmem:[%s1 + $0x40] sm:$0xf]
  %v43 = vld [vmem:[%s1 + $0x44] sm:$0xf]
  %v44 = vld [vmem:[%s1 + $0x48] sm:$0xf]
  %v45 = vld [vmem:[%s1 + $0x4c] sm:$0xf]
  %v46 = vld [vmem:[%s1 + $0x50] sm:$0xf]
  %v47 = vld [vmem:[%s1 + $0x54] sm:$0xf]
  %v48 = vld [vmem:[%s1 + $0x58] sm:$0xf]
  %v49 = vld [vmem:[%s1 + $0x5c] sm:$0xf]
  %v50 = vld [vmem:[%s1 + $0x60] sm:$0xf]
  %v51 = vld [vmem:[%s1 + $0x64] sm:$0xf]
  %v52 = vld [vmem:[%s1 + $0x68] sm:$0xf]
  %v53 = vld [vmem:[%s1 + $0x6c] sm:$0xf]
  %v54 = vld [vmem:[%s1 + $0x70] sm:$0xf]
  %v55 = vld [vmem:[%s1 + $0x74] sm:$0xf]
  %v56 = vld [vmem:[%s1 + $0x78] sm:$0xf]
  %v57 = vld [vmem:[%s1 + $0x7c] sm:$0xf]
  %v58 = vld [vmem:[%s1 + $0x80] sm:$0xf]
  %v59 = vld [vmem:[%s1 + $0x84] sm:$0xf]
  %v60 = vld [vmem:[%s2] sm:$0xff]
  %v61 = vld [vmem:[%s2 + $0x8] sm:$0xff]
  %v62 = vld [vmem:[%s2 + $0x10] sm:$0xff]
  %v63 = vld [vmem:[%s2 + $0x18] sm:$0xff]
  %65 = vset.pattern.permute.xlu0 0
  %66 = vperm.xlu0 %65, %v60
  %v67 = vpop.permute.xlu0 %66
  %70 = vset.pattern.permute.xlu0 0
  %71 = vperm.xlu0 %70, %v61
  %v72 = vpop.permute.xlu0 %71
  %75 = vset.pattern.permute.xlu0 0
  %76 = vperm.xlu0 %75, %v62
  %v77 = vpop.permute.xlu0 %76
  %80 = vset.pattern.permute.xlu0 0
  %81 = vperm.xlu0 %80, %v63
  %v82 = vpop.permute.xlu0 %81
  %v92 = vunpack.c.l.b16 %v18
  %v93 = vunpack.c.h.b16 %v18
  %v94 = vunpack.c.l.b16 %v19
  %v95 = vunpack.c.l.b16 %v20
  %v96 = vunpack.c.h.b16 %v20
  %v97 = vunpack.c.l.b16 %v21
  %v98 = vunpack.c.l.b16 %v22
  %v99 = vunpack.c.h.b16 %v22
  %v100 = vunpack.c.l.b16 %v23
  %v101 = vunpack.c.l.b16 %v24
  %v102 = vunpack.c.h.b16 %v24
  %v103 = vunpack.c.l.b16 %v25
  %v104 = vpack.c.b16 %v95, %v92
  %v105 = vpack.c.b16 %v96, %v93
  %v106 = vpack.c.b16 %v97, %v94
  %v107 = vpack.c.b16 %v101, %v98
  %v108 = vpack.c.b16 %v102, %v99
  %v109 = vpack.c.b16 %v103, %v100
  %v148 = vunpack.c.l.b16 %v26
  %v149 = vunpack.c.l.b16 %v27
  %v150 = vunpack.c.l.b16 %v28
  %v151 = vunpack.c.l.b16 %v29
  %v152 = vunpack.c.l.b16 %v30
  %v153 = vunpack.c.l.b16 %v31
  %v154 = vunpack.c.l.b16 %v32
  %v155 = vunpack.c.l.b16 %v33
  %v156 = vunpack.c.l.b16 %v34
  %v157 = vunpack.c.l.b16 %v35
  %v158 = vunpack.c.l.b16 %v36
  %v159 = vunpack.c.l.b16 %v37
  %v160 = vunpack.c.l.b16 %v38
  %v161 = vunpack.c.l.b16 %v39
  %v162 = vunpack.c.l.b16 %v40
  %v163 = vunpack.c.l.b16 %v41
  %v164 = vunpack.c.l.b16 %v42
  %v165 = vunpack.c.l.b16 %v43
  %v166 = vunpack.c.l.b16 %v44
  %v167 = vunpack.c.l.b16 %v45
  %v168 = vunpack.c.l.b16 %v46
  %v169 = vunpack.c.l.b16 %v47
  %v170 = vunpack.c.l.b16 %v48
  %v171 = vunpack.c.l.b16 %v49
  %v172 = vunpack.c.l.b16 %v50
  %v173 = vunpack.c.l.b16 %v51
  %v174 = vunpack.c.l.b16 %v52
  %v175 = vunpack.c.l.b16 %v53
  %v176 = vunpack.c.l.b16 %v54
  %v177 = vunpack.c.l.b16 %v55
  %v178 = vunpack.c.l.b16 %v56
  %v179 = vunpack.c.l.b16 %v57
  %v180 = vunpack.c.l.b16 %v58
  %v181 = vunpack.c.l.b16 %v59
  %v182 = vpack.c.b16 %v149, %v148
  %v183 = vpack.c.b16 %v151, %v150
  %v184 = vpack.c.b16 %v153, %v152
  %v185 = vpack.c.b16 %v155, %v154
  %v186 = vpack.c.b16 %v157, %v156
  %v187 = vpack.c.b16 %v159, %v158
  %v188 = vpack.c.b16 %v161, %v160
  %v189 = vpack.c.b16 %v163, %v162
  %v190 = vpack.c.b16 %v165, %v164
  %v191 = vpack.c.b16 %v167, %v166
  %v192 = vpack.c.b16 %v169, %v168
  %v193 = vpack.c.b16 %v171, %v170
  %v194 = vpack.c.b16 %v173, %v172
  %v195 = vpack.c.b16 %v175, %v174
  %v196 = vpack.c.b16 %v177, %v176
  %v197 = vpack.c.b16 %v179, %v178
  %v198 = vpack.c.b16 %v181, %v180
  %vm216 = vcmask 130048
  %v218 = vsel %vm216, %v106, 0
  %v221 = vsel %vm216, %v109, 0
  %223 = vmatprep.subr.bf16.mxu0 0
  %224 = vmatpush1.bf16.msra.mxu0 %v182
  %225 = vmatprep.subr.bf16.mxu0 0
  %226 = vmatpush1.bf16.msra.mxu0 %v183
  %227 = vmatprep.subr.bf16.mxu0 0
  %228 = vmatpush1.bf16.msra.mxu0 %v184
  %229 = vmatprep.subr.bf16.mxu0 0
  %230 = vmatpush1.bf16.msra.mxu0 %v185
  %231 = vmatprep.subr.bf16.mxu0 0
  %232 = vmatpush1.bf16.msra.mxu0 %v186
  %233 = vmatprep.subr.bf16.mxu0 0
  %234 = vmatpush1.bf16.msra.mxu0 %v187
  %235 = vmatprep.subr.bf16.mxu0 0
  %236 = vmatpush1.bf16.msra.mxu0 %v188
  %237 = vmatprep.subr.bf16.mxu0 0
  %238 = vmatpush1.bf16.msra.mxu0 %v189
  %239 = vmatprep.subr.bf16.mxu0 0
  %240 = vmatpush1.bf16.msra.mxu0 %v190
  %241 = vmatprep.subr.bf16.mxu0 0
  %242 = vmatpush1.bf16.msra.mxu0 %v191
  %243 = vmatprep.subr.bf16.mxu0 0
  %244 = vmatpush1.bf16.msra.mxu0 %v192
  %245 = vmatprep.subr.bf16.mxu0 0
  %246 = vmatpush1.bf16.msra.mxu0 %v193
  %247 = vmatprep.subr.bf16.mxu0 0
  %248 = vmatpush1.bf16.msra.mxu0 %v194
  %249 = vmatprep.subr.bf16.mxu0 0
  %250 = vmatpush1.bf16.msra.mxu0 %v195
  %251 = vmatprep.subr.bf16.mxu0 0
  %252 = vmatpush1.bf16.msra.mxu0 %v196
  %253 = vmatprep.subr.bf16.mxu0 0
  %254 = vmatpush1.bf16.msra.mxu0 %v197
  %255 = vmatprep.mubr.bf16.mxu0 %v105
  %256 = vmatmul.mubr.bf16.gmra.mrb[0].mxu0 %v104
  %v257 = vpop.f32.mrb[0].mxu0
  %v258 = vadd.f32 %v67, %v257
  %v259 = vpop.f32.mrb[0].mxu0
  %v260 = vpop.f32.mrb[0].mxu0
  %v261 = vadd.f32 %v72, %v260
  %v262 = vpop.f32.mrb[0].mxu0
  %263 = vmatprep.mubr.bf16.mxu0 %v108
  %264 = vmatmul.mubr.bf16.gmra.mrb[0].mxu0 %v107
  %v265 = vpop.f32.mrb[0].mxu0
  %v266 = vadd.f32 %v77, %v265
  %v267 = vpop.f32.mrb[0].mxu0
  %v268 = vpop.f32.mrb[0].mxu0
  %v269 = vadd.f32 %v82, %v268
  %v270 = vpop.f32.mrb[0].mxu0
  %271 = vdwg.mxu0
  %272 = vmatprep.subr.bf16.mxu0 0
  %273 = vmatpush1.bf16.msra.mxu0 %v198
  %274 = vmatprep.subr.bf16.mxu0 0
  %275 = vmatpush1.bf16.msra.mxu0 0
  %276 = vmatprep.subr.bf16.mxu0 0
  %277 = vmatpush1.bf16.msra.mxu0 0
  %278 = vmatprep.subr.bf16.mxu0 0
  %279 = vmatpush1.bf16.msra.mxu0 0
  %280 = vmatprep.subr.bf16.mxu0 0
  %281 = vmatpush1.bf16.msra.mxu0 0
  %282 = vmatprep.subr.bf16.mxu0 0
  %283 = vmatpush1.bf16.msra.mxu0 0
  %284 = vmatprep.subr.bf16.mxu0 0
  %285 = vmatpush1.bf16.msra.mxu0 0
  %286 = vmatprep.subr.bf16.mxu0 0
  %287 = vmatpush1.bf16.msra.mxu0 0
  %288 = vmatprep.subr.bf16.mxu0 0
  %289 = vmatpush1.bf16.msra.mxu0 0
  %290 = vmatprep.subr.bf16.mxu0 0
  %291 = vmatpush1.bf16.msra.mxu0 0
  %292 = vmatprep.subr.bf16.mxu0 0
  %293 = vmatpush1.bf16.msra.mxu0 0
  %294 = vmatprep.subr.bf16.mxu0 0
  %295 = vmatpush1.bf16.msra.mxu0 0
  %296 = vmatprep.subr.bf16.mxu0 0
  %297 = vmatpush1.bf16.msra.mxu0 0
  %298 = vmatprep.subr.bf16.mxu0 0
  %299 = vmatpush1.bf16.msra.mxu0 0
  %300 = vmatprep.subr.bf16.mxu0 0
  %301 = vmatpush1.bf16.msra.mxu0 0
  %302 = vmatprep.subr.bf16.mxu0 0
  %303 = vmatpush1.bf16.msra.mxu0 0
  %304 = vmatprep.mubr.bf16.mxu0 0
  %305 = vmatmul.mubr.bf16.gmra.mrb[0].mxu0 %v218
  %v306 = vpop.f32.mrb[0].mxu0
  %v307 = vadd.f32 %v258, %v306
  %v308 = vpop.f32.mrb[0].mxu0
  %v309 = vpop.f32.mrb[0].mxu0
  %v310 = vadd.f32 %v261, %v309
  %v311 = vpop.f32.mrb[0].mxu0
  %312 = vmatprep.mubr.bf16.mxu0 0
  %313 = vmatmul.mubr.bf16.gmra.mrb[0].mxu0 %v221
  %v314 = vpop.f32.mrb[0].mxu0
  %v315 = vadd.f32 %v266, %v314
  %v316 = vpop.f32.mrb[0].mxu0
  %v317 = vpop.f32.mrb[0].mxu0
  %v318 = vadd.f32 %v269, %v317
  %v319 = vpop.f32.mrb[0].mxu0
  %320 = vdwg.mxu0
  %vm321 = vcmp.ge.f32.partialorder %v307, 0.0
  %vm322 = vcmp.ge.f32.partialorder %v310, 0.0
  %vm323 = vcmp.ge.f32.partialorder %v315, 0.0
  %vm324 = vcmp.ge.f32.partialorder %v318, 0.0
  %v325 = vld [vmem:[%s3] sm:$0xff]
  %v326 = vld [vmem:[%s3 + $0x8] sm:$0xff]
  %v327 = vld [vmem:[%s3 + $0x10] sm:$0xff]
  %v328 = vld [vmem:[%s3 + $0x18] sm:$0xff]
  %330 = vset.pattern.permute.xlu0 0
  %331 = vperm.xlu0 %330, %v325
  %v332 = vpop.permute.xlu0 %331
  %335 = vset.pattern.permute.xlu0 0
  %336 = vperm.xlu0 %335, %v326
  %v337 = vpop.permute.xlu0 %336
  %340 = vset.pattern.permute.xlu0 0
  %341 = vperm.xlu0 %340, %v327
  %v342 = vpop.permute.xlu0 %341
  %345 = vset.pattern.permute.xlu0 0
  %346 = vperm.xlu0 %345, %v328
  %v347 = vpop.permute.xlu0 %346
  %v349 = vmul.f32 %v332, %v307
  %v350 = vmul.f32 %v337, %v310
  %v351 = vmul.f32 %v342, %v315
  %v352 = vmul.f32 %v347, %v318
  %v353 = vsel %vm321, %v307, %v349
  %v354 = vsel %vm322, %v310, %v350
  %v355 = vsel %vm323, %v315, %v351
  %v356 = vsel %vm324, %v318, %v352
  %357 = vst [vmem:[%s4] sm:$0xff] %v353
  %358 = vst [vmem:[%s4 + $0x8] sm:$0xff] %v354
  %359 = vst [vmem:[%s4 + $0x10] sm:$0xff] %v355
  %360 = vst [vmem:[%s4 + $0x18] sm:$0xff] %v356
  // Predicated region
  $region18: #{mix_forward.1} parent=0 // pred_check
    _
  $region19: #{mix_forward.1} parent=0 // pred_check_branch
    %362 = sbr.rel (0) target = $region21
  $region20: #{mix_forward.1} parent=0 // pred_region
    _
  $region21: #{mix_forward.1} parent=0 // pred_fallthru
    _
  // Predicated region
  $region22: #{mix_forward.1} parent=0 // pred_check
    _
  $region23: #{mix_forward.1} parent=0 // pred_check_branch
    %364 = sbr.rel (0) target = $region25
  $region24: #{mix_forward.1} parent=0 // pred_region
    _
  $region25: #{mix_forward.1} parent=0 // pred_fallthru
    _

</llo_original>
